<compile_context>
chip_gen: v7x
topology: tpu7x:2x2x1
jax: 0.10.0
libtpu: 0.0.40
codegen_flags: <defaults>
</compile_context>

<pallas_src>
import functools

import jax
import jax.numpy as jnp
from jax.experimental import pallas as pl
from jax.experimental.pallas import tpu as pltpu


# ----------------------------------------------------------------------------
# Fused Pallas kernel: conv(3x3)+bias+ReLU+GAP+fc+sigmoid for a tile of T images.
# ----------------------------------------------------------------------------
def _fused_timm_kernel(x_ref, w_ref, fcw_ref, fcb_ref, o_ref, *,
                       T, H, W, pad, activate):
    """One grid step == one tile of T images.

    x_ref   : (T, HW + 2*pad) f32   zero-padded, flattened 1-channel images
    w_ref   : (C, 16)         bf16  packed conv weights: 9 taps + bias + 6 zero cols
    fcw_ref : (1, C)          f32   head weights already divided by H*W
    fcb_ref : (1,)            f32   head bias (SMEM scalar)
    o_ref   : (1, 1, 128)     f32   lane-dense logits for the T images of this tile
    """
    HW = H * W
    C, K = w_ref.shape                                        # K == 16
    padrows = x_ref[...]                                      # (T, HW + 2*pad) f32

    # Column-validity masks (horizontal wrap across row boundaries).  Vertical
    # OOB taps need no mask: pad >= W+1, so those slices read the zero padding.
    px = jax.lax.broadcasted_iota(jnp.int32, (1, HW), 1) % W
    left_ok = px >= 1                                         # dx == -1 taps
    right_ok = px <= W - 2                                    # dx == +1 taps

    taps = []
    for dy in (-1, 0, 1):
        for dx in (-1, 0, 1):
            s = dy * W + dx
            shifted = padrows[:, pad + s: pad + s + HW]       # (T, HW) static slice
            if dx == -1:
                shifted = jnp.where(left_ok, shifted, 0.0)
            elif dx == 1:
                shifted = jnp.where(right_ok, shifted, 0.0)
            taps.append(shifted.astype(jnp.bfloat16))
    taps.append(jnp.ones((T, HW), jnp.bfloat16))              # conv-bias "tap"
    zero_row = jnp.zeros((T, HW), jnp.bfloat16)
    taps.extend([zero_row] * (K - len(taps)))                 # pad contraction 10->16
    patches = jnp.stack(taps, axis=1)                         # (T, 16, HW) bf16

    # conv as ONE batched MXU matmul: bf16 operands, f32 accumulation.
    w_b = jnp.broadcast_to(w_ref[...][None, :, :], (T, C, K)) # (T, C, 16) bf16
    conv = jnp.einsum("tck,tkp->tcp", w_b, patches,
                      preferred_element_type=jnp.float32)     # (T, C, HW) f32
    conv = jnp.maximum(conv, 0.0)                             # ReLU

    # GAP first (lane reduce), then head fc as a tiny rhs-transposed matmul that
    # lands the logits in lanes -> one unmasked lane-dense (1,128) store.
    gap = jnp.sum(conv, axis=2)                               # (T, C) f32
    row = jnp.einsum("xc,tc->xt", fcw_ref[...], gap,
                     preferred_element_type=jnp.float32)      # (1, T)
    row = row + fcb_ref[0]
    if activate:
        row = jax.nn.sigmoid(row)                             # num_classes == 1

    if T < 128:
        row = jnp.concatenate(
            [row, jnp.zeros((1, 128 - T), row.dtype)], axis=1)
    o_ref[0] = row.astype(o_ref.dtype)


# ----------------------------------------------------------------------------
# Host-side wrapper (reshape / pad / weight packing only — no im2col blow-up)
# ----------------------------------------------------------------------------
def _pack_conv_weights(params, k_pad=16):
    """(C,1,3,3) conv weights + bias -> (C, 16) bf16 matrix (taps||bias||zeros)."""
    C = params["conv_w"].shape[0]
    w_taps = params["conv_w"].reshape(C, 9)
    packed = jnp.concatenate(
        [w_taps, params["conv_b"][:, None],
         jnp.zeros((C, k_pad - 10), w_taps.dtype)], axis=1)
    return packed.astype(jnp.bfloat16)


def timm_model_forward(params, x_nchw, activate=True):
    B, C_IN, H, W = x_nchw.shape
    assert C_IN == 1, "synthetic backbone stem assumes in_chans=1"
    HW = H * W
    C = params["conv_w"].shape[0]

    # Padding must cover every 3x3 tap shift (|s| <= W+1); round up to a multiple
    # of 128 so the hot center-tap slice is lane-aligned.
    PAD = ((W + 1 + 127) // 128) * 128
    assert PAD >= W + 1
    ROWLEN = HW + 2 * PAD

    # Batch tile: whole batch if small, else tiles of 64 (multiple of 8 so the
    # (T, ROWLEN) input block satisfies the (8,128) rule when G > 1).
    T_MAX = 64
    T = B if B <= T_MAX else T_MAX
    B_pad = ((B + T - 1) // T) * T
    G = B_pad // T

    x_flat = x_nchw.reshape(B, HW).astype(jnp.float32)
    x_pad = jnp.pad(x_flat, ((0, B_pad - B), (PAD, PAD)))      # (B_pad, ROWLEN)

    w_ck = _pack_conv_weights(params)                          # (C, 16) bf16
    fcw = (params["fc_w"].reshape(1, C) / float(HW)).astype(jnp.float32)
    fcb = params["fc_b"].reshape(1).astype(jnp.float32)        # (1,) SMEM scalar

    kernel = functools.partial(_fused_timm_kernel, T=T, H=H, W=W, pad=PAD,
                               activate=activate)

    cost = pl.CostEstimate(
        flops=int(B_pad * (2 * C * 16 * HW + 3 * C * HW + 2 * C)),
        transcendentals=int(B_pad),
        bytes_accessed=int(x_pad.size * 4 + w_ck.size * 2 + fcw.size * 4
                           + 4 + G * 128 * 4),
    )

    out_slab = pl.pallas_call(
        kernel,
        out_shape=jax.ShapeDtypeStruct((G, 1, 128), jnp.float32),
        grid=(G,),
        in_specs=[
            pl.BlockSpec((T, ROWLEN), lambda g: (g, 0)),          # image tile
            pl.BlockSpec((C, 16), lambda g: (0, 0)),              # conv weights
            pl.BlockSpec((1, C), lambda g: (0, 0)),               # head weights
            pl.BlockSpec(memory_space=pltpu.MemorySpace.SMEM),    # head bias
        ],
        out_specs=pl.BlockSpec((1, 1, 128), lambda g: (g, 0, 0)),
        compiler_params=pltpu.CompilerParams(
            dimension_semantics=("parallel",)),
        cost_estimate=cost,
    )(x_pad, w_ck, fcw, fcb)

    logits = out_slab[:, 0, :T].reshape(G * T)[:B]
    return logits[:, None]                                        # (B, 1)


# ----------------------------------------------------------------------------
# Plain-JAX reference (mirrors the bf16-matmul quantization of the kernel)
# ----------------------------------------------------------------------------
def forward_reference(params, x_nchw, activate=True):
    B, C_IN, H, W = x_nchw.shape
    C = params["conv_w"].shape[0]
    xp = jnp.pad(x_nchw[:, 0], ((0, 0), (1, 1), (1, 1)))          # (B,H+2,W+2)
    cols = [xp[:, dy:dy + H, dx:dx + W] for dy in range(3) for dx in range(3)]
    patches = jnp.stack(cols, axis=-1).reshape(B, H * W, 9)
    patches = jnp.concatenate(
        [patches, jnp.ones((B, H * W, 1), patches.dtype)], axis=-1)  # bias column
    w_ck = _pack_conv_weights(params)[:, :10]                     # (C, 10) bf16
    conv = jnp.einsum("bpk,ck->bpc", patches.astype(jnp.bfloat16), w_ck,
                      preferred_element_type=jnp.float32)
    conv = jnp.maximum(conv, 0.0)
    feat = jnp.mean(conv, axis=1)                                 # (B, C)
    logit = feat @ params["fc_w"].reshape(C, 1) + params["fc_b"]  # (B, 1)
    return jax.nn.sigmoid(logit) if activate else logit


# ----------------------------------------------------------------------------
# Parameter init for the synthetic backbone stand-in
# ----------------------------------------------------------------------------
def init_params(key, in_chans=1, cnn_features=32, num_classes=1):
    ks = jax.random.split(key, 4)
    scale = 0.1
    return {
        "conv_w": scale * jax.random.normal(ks[0], (cnn_features, in_chans, 3, 3), jnp.float32),
        "conv_b": scale * jax.random.normal(ks[1], (cnn_features,), jnp.float32),
        "fc_w": scale * jax.random.normal(ks[2], (cnn_features, num_classes), jnp.float32),
        "fc_b": scale * jax.random.normal(ks[3], (num_classes,), jnp.float32),
    }


if __name__ == "__main__":
    key = jax.random.PRNGKey(0)
    kx, kp = jax.random.split(key)

    B, C_IN, H, W = 2, 1, 16, 16            # NCHW input, in_chans=1 (per module)
    x = jax.random.normal(kx, (B, C_IN, H, W), jnp.float32)
    params = init_params(kp, in_chans=C_IN, cnn_features=32, num_classes=1)

    out = timm_model_forward(params, x, activate=True)
    out = jax.block_until_ready(out)

    ref = forward_reference(params, x, activate=True)
    assert out.shape == (B, 1)
    assert jnp.allclose(out, ref, atol=1e-3, rtol=1e-3), (out, ref)

    print("KERNEL_OK")
</pallas_src>

<mosaic_0001>
module attributes {stable_mosaic.version = 11 : i64} {
  func.func @_fused_timm_kernel(%arg0: i32, %arg1: memref<2x512xf32, #tpu.memory_space<vmem>>, %arg2: memref<32x16xbf16, #tpu.memory_space<vmem>>, %arg3: memref<1x32xf32, #tpu.memory_space<vmem>>, %arg4: memref<1xf32, #tpu.memory_space<smem>>, %arg5: memref<1x1x128xf32, #tpu.memory_space<vmem>>) attributes {dimension_semantics = [#tpu.dimension_semantics<parallel>], iteration_bounds = array<i64: 1>, scalar_prefetch = 0 : i64, scratch_operands = 0 : i64, tpu.core_type = #tpu.core_type<tc>, window_params = [{transform_indices = @transform_0, window_bounds = array<i64: 2, 512>}, {pipeline_mode = #tpu.pipeline_mode<synchronous>, transform_indices = @transform_1, window_bounds = array<i64: 32, 16>}, {pipeline_mode = #tpu.pipeline_mode<synchronous>, transform_indices = @transform_2, window_bounds = array<i64: 1, 32>}, {transform_indices = @transform_3, window_bounds = array<i64: 1>}, {transform_indices = @transform_4, window_bounds = array<i64: 1, 1, 128>}]} {
    %c0 = arith.constant 0 : index
    %c0_0 = arith.constant 0 : index
    %0 = vector.load %arg1[%c0, %c0_0] : memref<2x512xf32, #tpu.memory_space<vmem>>, vector<2x512xf32>
    %1 = tpu.iota {dimensions = array<i32: 1>} : vector<1x256xi32>
    %c16_i32 = arith.constant 16 : i32
    %c0_i32 = arith.constant 0 : i32
    %2 = arith.cmpi eq, %c16_i32, %c0_i32 : i32
    %c1_i32 = arith.constant 1 : i32
    %3 = arith.select %2, %c1_i32, %c16_i32 : i32
    %4 = vector.broadcast %3 : i32 to vector<1x256xi32>
    %5 = arith.remsi %1, %4 : vector<1x256xi32>
    %c0_i32_1 = arith.constant 0 : i32
    %6 = vector.broadcast %c0_i32_1 : i32 to vector<1x256xi32>
    %7 = arith.cmpi ne, %5, %6 : vector<1x256xi32>
    %c0_i32_2 = arith.constant 0 : i32
    %8 = vector.broadcast %c0_i32_2 : i32 to vector<1x256xi32>
    %9 = arith.cmpi slt, %5, %8 : vector<1x256xi32>
    %c0_i32_3 = arith.constant 0 : i32
    %10 = arith.cmpi slt, %3, %c0_i32_3 : i32
    %11 = vector.broadcast %10 : i1 to vector<1x256xi1>
    %12 = vector.broadcast %11 : vector<1x256xi1> to vector<1x256xi1>
    %13 = arith.xori %9, %12 : vector<1x256xi1>
    %14 = arith.andi %13, %7 : vector<1x256xi1>
    %15 = vector.broadcast %3 : i32 to vector<1x256xi32>
    %16 = arith.addi %5, %15 : vector<1x256xi32>
    %17 = arith.select %14, %16, %5 : vector<1x256xi1>, vector<1x256xi32>
    %c1_i32_4 = arith.constant 1 : i32
    %18 = vector.broadcast %c1_i32_4 : i32 to vector<1x256xi32>
    %19 = arith.cmpi sge, %17, %18 : vector<1x256xi32>
    %c14_i32 = arith.constant 14 : i32
    %20 = vector.broadcast %c14_i32 : i32 to vector<1x256xi32>
    %21 = arith.cmpi sle, %17, %20 : vector<1x256xi32>
    %22 = vector.extract_strided_slice %0 {offsets = [0, 111], sizes = [2, 256], strides = [1, 1]} : vector<2x512xf32> to vector<2x256xf32>
    %cst = arith.constant 0.000000e+00 : f32
    %23 = vector.shape_cast %19 : vector<1x256xi1> to vector<1x256xi1>
    %24 = vector.broadcast %23 : vector<1x256xi1> to vector<2x256xi1>
    %25 = vector.broadcast %cst : f32 to vector<2x256xf32>
    %26 = arith.select %24, %22, %25 : vector<2x256xi1>, vector<2x256xf32>
    %27 = arith.truncf %26 : vector<2x256xf32> to vector<2x256xbf16>
    %28 = vector.extract_strided_slice %0 {offsets = [0, 112], sizes = [2, 256], strides = [1, 1]} : vector<2x512xf32> to vector<2x256xf32>
    %29 = arith.truncf %28 : vector<2x256xf32> to vector<2x256xbf16>
    %30 = vector.extract_strided_slice %0 {offsets = [0, 113], sizes = [2, 256], strides = [1, 1]} : vector<2x512xf32> to vector<2x256xf32>
    %cst_5 = arith.constant 0.000000e+00 : f32
    %31 = vector.shape_cast %21 : vector<1x256xi1> to vector<1x256xi1>
    %32 = vector.broadcast %31 : vector<1x256xi1> to vector<2x256xi1>
    %33 = vector.broadcast %cst_5 : f32 to vector<2x256xf32>
    %34 = arith.select %32, %30, %33 : vector<2x256xi1>, vector<2x256xf32>
    %35 = arith.truncf %34 : vector<2x256xf32> to vector<2x256xbf16>
    %36 = vector.extract_strided_slice %0 {offsets = [0, 127], sizes = [2, 256], strides = [1, 1]} : vector<2x512xf32> to vector<2x256xf32>
    %cst_6 = arith.constant 0.000000e+00 : f32
    %37 = vector.shape_cast %19 : vector<1x256xi1> to vector<1x256xi1>
    %38 = vector.broadcast %37 : vector<1x256xi1> to vector<2x256xi1>
    %39 = vector.broadcast %cst_6 : f32 to vector<2x256xf32>
    %40 = arith.select %38, %36, %39 : vector<2x256xi1>, vector<2x256xf32>
    %41 = arith.truncf %40 : vector<2x256xf32> to vector<2x256xbf16>
    %42 = vector.extract_strided_slice %0 {offsets = [0, 128], sizes = [2, 256], strides = [1, 1]} : vector<2x512xf32> to vector<2x256xf32>
    %43 = arith.truncf %42 : vector<2x256xf32> to vector<2x256xbf16>
    %44 = vector.extract_strided_slice %0 {offsets = [0, 129], sizes = [2, 256], strides = [1, 1]} : vector<2x512xf32> to vector<2x256xf32>
    %cst_7 = arith.constant 0.000000e+00 : f32
    %45 = vector.shape_cast %21 : vector<1x256xi1> to vector<1x256xi1>
    %46 = vector.broadcast %45 : vector<1x256xi1> to vector<2x256xi1>
    %47 = vector.broadcast %cst_7 : f32 to vector<2x256xf32>
    %48 = arith.select %46, %44, %47 : vector<2x256xi1>, vector<2x256xf32>
    %49 = arith.truncf %48 : vector<2x256xf32> to vector<2x256xbf16>
    %50 = vector.extract_strided_slice %0 {offsets = [0, 143], sizes = [2, 256], strides = [1, 1]} : vector<2x512xf32> to vector<2x256xf32>
    %cst_8 = arith.constant 0.000000e+00 : f32
    %51 = vector.shape_cast %19 : vector<1x256xi1> to vector<1x256xi1>
    %52 = vector.broadcast %51 : vector<1x256xi1> to vector<2x256xi1>
    %53 = vector.broadcast %cst_8 : f32 to vector<2x256xf32>
    %54 = arith.select %52, %50, %53 : vector<2x256xi1>, vector<2x256xf32>
    %55 = arith.truncf %54 : vector<2x256xf32> to vector<2x256xbf16>
    %56 = vector.extract_strided_slice %0 {offsets = [0, 144], sizes = [2, 256], strides = [1, 1]} : vector<2x512xf32> to vector<2x256xf32>
    %57 = arith.truncf %56 : vector<2x256xf32> to vector<2x256xbf16>
    %58 = vector.extract_strided_slice %0 {offsets = [0, 145], sizes = [2, 256], strides = [1, 1]} : vector<2x512xf32> to vector<2x256xf32>
    %cst_9 = arith.constant 0.000000e+00 : f32
    %59 = vector.shape_cast %21 : vector<1x256xi1> to vector<1x256xi1>
    %60 = vector.broadcast %59 : vector<1x256xi1> to vector<2x256xi1>
    %61 = vector.broadcast %cst_9 : f32 to vector<2x256xf32>
    %62 = arith.select %60, %58, %61 : vector<2x256xi1>, vector<2x256xf32>
    %63 = arith.truncf %62 : vector<2x256xf32> to vector<2x256xbf16>
    %cst_10 = arith.constant 1.000000e+00 : bf16
    %64 = vector.broadcast %cst_10 : bf16 to vector<2x256xbf16>
    %cst_11 = arith.constant 0.000000e+00 : bf16
    %65 = vector.broadcast %cst_11 : bf16 to vector<2x256xbf16>
    %66 = vector.shape_cast %27 : vector<2x256xbf16> to vector<2x1x256xbf16>
    %67 = vector.shape_cast %29 : vector<2x256xbf16> to vector<2x1x256xbf16>
    %68 = vector.shape_cast %35 : vector<2x256xbf16> to vector<2x1x256xbf16>
    %69 = vector.shape_cast %41 : vector<2x256xbf16> to vector<2x1x256xbf16>
    %70 = vector.shape_cast %43 : vector<2x256xbf16> to vector<2x1x256xbf16>
    %71 = vector.shape_cast %49 : vector<2x256xbf16> to vector<2x1x256xbf16>
    %72 = vector.shape_cast %55 : vector<2x256xbf16> to vector<2x1x256xbf16>
    %73 = vector.shape_cast %57 : vector<2x256xbf16> to vector<2x1x256xbf16>
    %74 = vector.shape_cast %63 : vector<2x256xbf16> to vector<2x1x256xbf16>
    %75 = vector.shape_cast %64 : vector<2x256xbf16> to vector<2x1x256xbf16>
    %76 = vector.shape_cast %65 : vector<2x256xbf16> to vector<2x1x256xbf16>
    %77 = vector.shape_cast %65 : vector<2x256xbf16> to vector<2x1x256xbf16>
    %78 = vector.shape_cast %65 : vector<2x256xbf16> to vector<2x1x256xbf16>
    %79 = vector.shape_cast %65 : vector<2x256xbf16> to vector<2x1x256xbf16>
    %80 = vector.shape_cast %65 : vector<2x256xbf16> to vector<2x1x256xbf16>
    %81 = vector.shape_cast %65 : vector<2x256xbf16> to vector<2x1x256xbf16>
    %82 = tpu.concatenate %66, %67, %68, %69, %70, %71, %72, %73, %74, %75, %76, %77, %78, %79, %80, %81 in 1 : vector<2x1x256xbf16>, vector<2x1x256xbf16>, vector<2x1x256xbf16>, vector<2x1x256xbf16>, vector<2x1x256xbf16>, vector<2x1x256xbf16>, vector<2x1x256xbf16>, vector<2x1x256xbf16>, vector<2x1x256xbf16>, vector<2x1x256xbf16>, vector<2x1x256xbf16>, vector<2x1x256xbf16>, vector<2x1x256xbf16>, vector<2x1x256xbf16>, vector<2x1x256xbf16>, vector<2x1x256xbf16> -> vector<2x16x256xbf16>
    %c0_12 = arith.constant 0 : index
    %c0_13 = arith.constant 0 : index
    %83 = vector.load %arg2[%c0_12, %c0_13] : memref<32x16xbf16, #tpu.memory_space<vmem>>, vector<32x16xbf16>
    %84 = vector.shape_cast %83 : vector<32x16xbf16> to vector<1x32x16xbf16>
    %85 = vector.shape_cast %84 : vector<1x32x16xbf16> to vector<1x32x16xbf16>
    %86 = vector.broadcast %85 : vector<1x32x16xbf16> to vector<2x32x16xbf16>
    "tpu.trace_start"() <{level = 10 : i32, message = "tck,tkp->tcp"}> : () -> ()
    %cst_14 = arith.constant dense<0.000000e+00> : vector<2x32x256xf32>
    %87 = tpu.matmul %86, %82, %cst_14 {dimension_numbers = #tpu.dot_dimension_numbers<[2], [1], [1], [2], [0, 0, 0, 1, 1, 2], [0], [0]>} : vector<2x32x16xbf16>, vector<2x16x256xbf16>, vector<2x32x256xf32> -> vector<2x32x256xf32>
    "tpu.trace_stop"() : () -> ()
    %cst_15 = arith.constant 0.000000e+00 : f32
    %88 = vector.broadcast %cst_15 : f32 to vector<2x32x256xf32>
    %89 = arith.maximumf %87, %88 : vector<2x32x256xf32>
    %cst_16 = arith.constant dense<0.000000e+00> : vector<2x32xf32>
    %90 = vector.multi_reduction <add>, %89, %cst_16 [2] : vector<2x32x256xf32> to vector<2x32xf32>
    %c0_17 = arith.constant 0 : index
    %c0_18 = arith.constant 0 : index
    %91 = vector.load %arg3[%c0_17, %c0_18] : memref<1x32xf32, #tpu.memory_space<vmem>>, vector<1x32xf32>
    "tpu.trace_start"() <{level = 10 : i32, message = "xc,tc->xt"}> : () -> ()
    %cst_19 = arith.constant dense<0.000000e+00> : vector<1x2xf32>
    %92 = tpu.matmul %91, %90, %cst_19 {dimension_numbers = #tpu.dot_dimension_numbers<[1], [1], [0], [0], [0, 0, 1, 0], [], []>} : vector<1x32xf32>, vector<2x32xf32>, vector<1x2xf32> -> vector<1x2xf32>
    "tpu.trace_stop"() : () -> ()
    %c0_20 = arith.constant 0 : index
    %93 = memref.load %arg4[%c0_20] : memref<1xf32, #tpu.memory_space<smem>>
    %94 = vector.broadcast %93 : f32 to vector<1x2xf32>
    %95 = arith.addf %92, %94 : vector<1x2xf32>
    %96 = arith.negf %95 : vector<1x2xf32>
    %97 = math.exp %96 : vector<1x2xf32>
    %cst_21 = arith.constant 1.000000e+00 : f32
    %98 = vector.broadcast %cst_21 : f32 to vector<1x2xf32>
    %99 = arith.addf %98, %97 : vector<1x2xf32>
    %100 = arith.divf %98, %99 : vector<1x2xf32>
    %cst_22 = arith.constant 0.000000e+00 : f32
    %101 = vector.broadcast %cst_22 : f32 to vector<1x126xf32>
    %102 = tpu.concatenate %100, %101 in 1 : vector<1x2xf32>, vector<1x126xf32> -> vector<1x128xf32>
    %c0_23 = arith.constant 0 : index
    %c0_24 = arith.constant 0 : index
    %c0_25 = arith.constant 0 : index
    %103 = vector.load %arg5[%c0_23, %c0_24, %c0_25] : memref<1x1x128xf32, #tpu.memory_space<vmem>>, vector<1x1x128xf32>
    %104 = vector.shape_cast %103 : vector<1x1x128xf32> to vector<1x128xf32>
    %105 = vector.shape_cast %102 : vector<1x128xf32> to vector<1x1x128xf32>
    tpu.vector_store %arg5[%c0_23, %c0_24, %c0_25], %105 {strides = array<i32>} : memref<1x1x128xf32, #tpu.memory_space<vmem>>, vector<1x1x128xf32>,
    return
  }
  func.func @transform_0(%arg0: i32) -> (i32, i32) {
    %c0_i32 = arith.constant 0 : i32
    %c0_i32_0 = arith.constant 0 : i32
    return %arg0, %c0_i32 : i32, i32
  }
  func.func @transform_1(%arg0: i32) -> (i32, i32) {
    %c0_i32 = arith.constant 0 : i32
    %c0_i32_0 = arith.constant 0 : i32
    %c0_i32_1 = arith.constant 0 : i32
    return %c0_i32, %c0_i32_0 : i32, i32
  }
  func.func @transform_2(%arg0: i32) -> (i32, i32) {
    %c0_i32 = arith.constant 0 : i32
    %c0_i32_0 = arith.constant 0 : i32
    %c0_i32_1 = arith.constant 0 : i32
    return %c0_i32, %c0_i32_0 : i32, i32
  }
  func.func @transform_3(%arg0: i32) -> i32 {
    %c0_i32 = arith.constant 0 : i32
    %c0_i32_0 = arith.constant 0 : i32
    return %c0_i32 : i32
  }
  func.func @transform_4(%arg0: i32) -> (i32, i32, i32) {
    %c0_i32 = arith.constant 0 : i32
    %c0_i32_0 = arith.constant 0 : i32
    %c0_i32_1 = arith.constant 0 : i32
    return %arg0, %c0_i32, %c0_i32_0 : i32, i32, i32
  }
}

</mosaic_0001>

<llo_original>
// kernel: tpu_custom_call.1
$region0: #{tpu_custom_call.1}
  #allocation0 [shape = 'u32[]', space=smem, size = 0x4, offset = 0x4, fixed_abs, tag = 'smem constant byte address 0x4 - core index']
  #allocation1 [shape = 'u32[144,128]{1,0:T(1,128)}', space=vmem, size = 0x12000, scoped, tag = 'internal scratch']
  #allocation2 [shape = 'f32[1]{0:T(128)S(6)}', space=smem, size = 0x200, scoped, tag = 'scoped memory for tpu_custom_call.1']
  %s0 = inlined_call_operand.vmem [shape: f32[2,512], index: 0, kind: input, shape index: {}]
  %s1 = inlined_call_operand.vmem [shape: bf16[32,16], index: 1, kind: input, shape index: {}]
  %s2 = inlined_call_operand.vmem [shape: f32[1,32], index: 2, kind: input, shape index: {}]
  %s3 = inlined_call_operand.<no memory space> [shape: f32[1], index: 3, kind: input, shape index: {}]
  %s4 = inlined_call_operand.hbm [shape: f32[1,1,128], index: 4, kind: output, shape index: {}]
  %s5 = sld [smem:[#allocation0]]
  $region26: #{tpu_custom_call.1} parent=0
    _
  %s7 = ssub.s32 1, %s5
  %s8 = scalar_select 0, %s7, %s5
  %9 = sst [smem:[#allocation2]] %s3
  $region1: #{tpu_custom_call.1} parent=0
    #allocation3 [shape = 'u8[512]{0}', space=vmem, size = 0x400, scoped, tag = 'output window, operand 0, single buffered']
    #allocation4 [shape = 's32[1]{0}', space=sflag, size = 0x4, scoped, tag = 'scoped memory for tpu_custom_call.1']
    %10 = vsyncpa [#allocation4], 0
    // Predicated region
    $region2: #{tpu_custom_call.1} parent=1 // pred_check
      _
    $region3: #{tpu_custom_call.1} parent=1 // pred_check_branch
      %12 = sbr.rel (0) target = $region5
    $region4: #{tpu_custom_call.1} parent=1 // pred_region
      _
    $region5: #{tpu_custom_call.1} parent=1 // pred_fallthru
      _
    // Predicated region
    $region6: #{tpu_custom_call.1} parent=1 // pred_check
      _
    $region7: #{tpu_custom_call.1} parent=1 // pred_check_branch
      %14 = sbr.rel (0) target = $region9
    $region8: #{tpu_custom_call.1} parent=1 // pred_region
      _
    $region9: #{tpu_custom_call.1} parent=1 // pred_fallthru
      _
    // Predicated region
    $region10: #{tpu_custom_call.1} parent=1 // pred_check
      _
    $region11: #{tpu_custom_call.1} parent=1 // pred_check_branch
      %16 = sbr.rel (0) target = $region13
    $region12: #{tpu_custom_call.1} parent=1 // pred_region
      _
    $region13: #{tpu_custom_call.1} parent=1 // pred_fallthru
      _
    // Predicated region
    $region14: #{tpu_custom_call.1} parent=1 // pred_check
      _
    $region15: #{tpu_custom_call.1} parent=1 // pred_check_branch
      %18 = sbr.rel (0) target = $region17
    $region16: #{tpu_custom_call.1} parent=1 // pred_region
      _
    $region17: #{tpu_custom_call.1} parent=1 // pred_fallthru
      _
    %v21 = vld [vmem:[%s0] sm:$0xff]
    %v22 = vlaneseq
    %v23 = vand.u32 %v22, 127
    %v24 = vadd.s32 %v23, 128
    %vm25 = vcmp.lt.s32.totalorder %v23, 0
    %v26 = vsub.s32 0, %v23
    %v27 = vsel %vm25, %v26, %v23
    %v28 = vshrl.u32 %v27, 4
    %v29 = vand.u32 %v27, 15
    %v30 = vsub.s32 0, %v29
    %v31 = vsel %vm25, %v30, %v29
    %vm32 = vcmp.lt.s32.totalorder %v24, 0
    %v33 = vsub.s32 0, %v24
    %v34 = vsel %vm32, %v33, %v24
    %v35 = vshrl.u32 %v34, 4
    %v36 = vand.u32 %v34, 15
    %v37 = vsub.s32 0, %v36
    %v38 = vsel %vm32, %v37, %v36
    %vm39 = vcmp.ne.s32.totalorder %v31, 0
    %vm40 = vcmp.ne.s32.totalorder %v38, 0
    %vm41 = vcmp.lt.s32.totalorder %v31, 0
    %vm42 = vcmp.lt.s32.totalorder %v38, 0
    %vm43 = vmand %vm41, %vm39
    %vm44 = vmand %vm42, %vm40
    %v45 = vadd.s32 %v31, 16
    %v46 = vadd.s32 %v38, 16
    %v47 = vsel %vm43, %v45, %v31
    %v48 = vsel %vm44, %v46, %v38
    %vm49 = vcmp.ge.s32.totalorder %v47, 1
    %vm50 = vcmp.ge.s32.totalorder %v48, 1
    %vm51 = vcmp.le.s32.totalorder %v47, 14
    %vm52 = vcmp.le.s32.totalorder %v48, 14
    %v53 = vsel %vm49, 1, 0
    %v54 = vsel %vm50, 1, 0
    %vm55 = vcmp.eq.s32.totalorder %v53, 1
    %vm56 = vcmp.eq.s32.totalorder %v54, 1
    %v58 = vcombine.high %v21, %v21
    %v60 = vunpack.c.l.s4 1983009808
    %v61 = vunpack.c.0.s8 %v60
    %v62 = vlaneseq
    %v63 = vshrl.u32 %v62, 7
    %v64 = vsub.s32 %v61, %v63
    %v65 = vrot.slane %v21, %v64
    %v67 = vunpack.c.l.s4 1983009808
    %v68 = vunpack.c.0.s8 %v67
    %v69 = vlaneseq
    %v70 = vshrl.u32 %v69, 7
    %v71 = vsub.s32 %v68, %v70
    %v72 = vrot.slane %v58, %v71
    %v73 = vcombine.high %v65, %v65
    %74 = vrot.lane.b32.xlu0 %v65, 17
    %v75 = vpop.permute.xlu0 %74
    %76 = vrot.lane.b32.xlu0 %v73, 17
    %v77 = vpop.permute.xlu0 %76
    %78 = vrot.lane.b32.xlu0 %v72, 17
    %v79 = vpop.permute.xlu0 %78
    %vm80 = vcmask 138240
    %v81 = vsel %vm80, %v75, %v77
    %v82 = vsel %vm80, %v77, %v79
    %v85 = vsel %vm55, %v81, 0.0
    %v86 = vsel %vm56, %v82, 0.0
    %v87 = vpack.c.bf16 %v85, %v85
    %v88 = vpack.c.bf16 %v86, %v86
    %v92 = vpack.c.bf16 %v65, %v65
    %v93 = vpack.c.bf16 %v73, %v73
    %v94 = vpack.c.bf16 %v72, %v72
    %v95 = vsel %vm51, 1, 0
    %v96 = vsel %vm52, 1, 0
    %vm97 = vcmp.eq.s32.totalorder %v95, 1
    %vm98 = vcmp.eq.s32.totalorder %v96, 1
    %99 = vrot.lane.b32.xlu0 %v65, 15
    %v100 = vpop.permute.xlu0 %99
    %101 = vrot.lane.b32.xlu0 %v73, 15
    %v102 = vpop.permute.xlu0 %101
    %103 = vrot.lane.b32.xlu0 %v72, 15
    %v104 = vpop.permute.xlu0 %103
    %vm105 = vcmask 121856
    %v106 = vsel %vm105, %v100, %v102
    %v107 = vsel %vm105, %v102, %v104
    %v110 = vsel %vm97, %v106, 0.0
    %v111 = vsel %vm98, %v107, 0.0
    %v112 = vpack.c.bf16 %v110, %v110
    %v113 = vpack.c.bf16 %v111, %v111
    %114 = vrot.lane.b32.xlu0 %v65, 1
    %v115 = vpop.permute.xlu0 %114
    %116 = vrot.lane.b32.xlu0 %v73, 1
    %v117 = vpop.permute.xlu0 %116
    %118 = vrot.lane.b32.xlu0 %v72, 1
    %v119 = vpop.permute.xlu0 %118
    %vm120 = vcmask 7168
    %v121 = vsel %vm120, %v115, %v117
    %v122 = vsel %vm120, %v117, %v119
    %v125 = vsel %vm55, %v121, 0.0
    %v126 = vsel %vm56, %v122, 0.0
    %v127 = vpack.c.bf16 %v125, %v125
    %v128 = vpack.c.bf16 %v126, %v126
    %v129 = vcombine.high %v72, %v72
    %130 = vrot.lane.b32.xlu0 %v73, 127
    %v131 = vpop.permute.xlu0 %130
    %132 = vrot.lane.b32.xlu0 %v72, 127
    %v133 = vpop.permute.xlu0 %132
    %134 = vrot.lane.b32.xlu0 %v129, 127
    %v135 = vpop.permute.xlu0 %134
    %vm136 = vcmask 1039360
    %v137 = vsel %vm136, %v131, %v133
    %v138 = vsel %vm136, %v133, %v135
    %v141 = vsel %vm97, %v137, 0.0
    %v142 = vsel %vm98, %v138, 0.0
    %v143 = vpack.c.bf16 %v141, %v141
    %v144 = vpack.c.bf16 %v142, %v142
    %145 = vrot.lane.b32.xlu0 %v73, 113
    %v146 = vpop.permute.xlu0 %145
    %147 = vrot.lane.b32.xlu0 %v72, 113
    %v148 = vpop.permute.xlu0 %147
    %149 = vrot.lane.b32.xlu0 %v129, 113
    %v150 = vpop.permute.xlu0 %149
    %vm151 = vcmask 924672
    %v152 = vsel %vm151, %v146, %v148
    %v153 = vsel %vm151, %v148, %v150
    %v156 = vsel %vm55, %v152, 0.0
    %v157 = vsel %vm56, %v153, 0.0
    %v158 = vpack.c.bf16 %v156, %v156
    %v159 = vpack.c.bf16 %v157, %v157
    %160 = vrot.lane.b32.xlu0 %v73, 112
    %v161 = vpop.permute.xlu0 %160
    %162 = vrot.lane.b32.xlu0 %v72, 112
    %v163 = vpop.permute.xlu0 %162
    %164 = vrot.lane.b32.xlu0 %v129, 112
    %v165 = vpop.permute.xlu0 %164
    %vm166 = vcmask 916480
    %v167 = vsel %vm166, %v161, %v163
    %v168 = vsel %vm166, %v163, %v165
    %v171 = vpack.c.bf16 %v167, %v167
    %v172 = vpack.c.bf16 %v168, %v168
    %173 = vrot.lane.b32.xlu0 %v73, 111
    %v174 = vpop.permute.xlu0 %173
    %175 = vrot.lane.b32.xlu0 %v72, 111
    %v176 = vpop.permute.xlu0 %175
    %177 = vrot.lane.b32.xlu0 %v129, 111
    %v178 = vpop.permute.xlu0 %177
    %vm179 = vcmask 908288
    %v180 = vsel %vm179, %v174, %v176
    %v181 = vsel %vm179, %v176, %v178
    %v184 = vsel %vm97, %v180, 0.0
    %v185 = vsel %vm98, %v181, 0.0
    %v186 = vpack.c.bf16 %v184, %v184
    %v187 = vpack.c.bf16 %v185, %v185
    %v190 = vcombine.low %v87, %v88
    %v192 = vunpack.c.l.s4 1966171168
    %v193 = vunpack.c.0.s8 %v192
    %v194 = vlaneseq
    %v195 = vshrl.u32 %v194, 7
    %v196 = vsub.s32 %v193, %v195
    %v197 = vrot.slane %v190, %v196
    %v199 = vunpack.c.l.s4 1966171168
    %v200 = vunpack.c.0.s8 %v199
    %v201 = vlaneseq
    %v202 = vshrl.u32 %v201, 7
    %v203 = vsub.s32 %v200, %v202
    %v204 = vrot.slane %v197, %v203
    %v205 = vunpack.i.l.s16 %v204
    %v206 = vunpack.i.h.s16 %v204
    %v210 = vcombine.low %v92, %v93
    %v212 = vunpack.c.l.s4 1966171168
    %v213 = vunpack.c.0.s8 %v212
    %v214 = vlaneseq
    %v215 = vshrl.u32 %v214, 7
    %v216 = vsub.s32 %v213, %v215
    %v217 = vrot.slane %v210, %v216
    %v219 = vunpack.c.l.s4 1966171168
    %v220 = vunpack.c.0.s8 %v219
    %v221 = vlaneseq
    %v222 = vshrl.u32 %v221, 7
    %v223 = vsub.s32 %v220, %v222
    %v224 = vrot.slane %v94, %v223
    %v225 = vcombine.low %v217, %v224
    %v227 = vunpack.c.l.s4 1966171168
    %v228 = vunpack.c.0.s8 %v227
    %v229 = vlaneseq
    %v230 = vshrl.u32 %v229, 7
    %v231 = vsub.s32 %v228, %v230
    %v232 = vrot.slane %v225, %v231
    %v233 = vunpack.i.l.s16 %v232
    %v234 = vunpack.i.h.s16 %v232
    %v237 = vcombine.low %v112, %v113
    %v239 = vunpack.c.l.s4 1966171168
    %v240 = vunpack.c.0.s8 %v239
    %v241 = vlaneseq
    %v242 = vshrl.u32 %v241, 7
    %v243 = vsub.s32 %v240, %v242
    %v244 = vrot.slane %v237, %v243
    %v246 = vunpack.c.l.s4 1966171168
    %v247 = vunpack.c.0.s8 %v246
    %v248 = vlaneseq
    %v249 = vshrl.u32 %v248, 7
    %v250 = vsub.s32 %v247, %v249
    %v251 = vrot.slane %v244, %v250
    %v252 = vunpack.i.l.s16 %v251
    %v253 = vunpack.i.h.s16 %v251
    %v256 = vcombine.low %v127, %v128
    %v258 = vunpack.c.l.s4 1966171168
    %v259 = vunpack.c.0.s8 %v258
    %v260 = vlaneseq
    %v261 = vshrl.u32 %v260, 7
    %v262 = vsub.s32 %v259, %v261
    %v263 = vrot.slane %v256, %v262
    %v265 = vunpack.c.l.s4 1966171168
    %v266 = vunpack.c.0.s8 %v265
    %v267 = vlaneseq
    %v268 = vshrl.u32 %v267, 7
    %v269 = vsub.s32 %v266, %v268
    %v270 = vrot.slane %v263, %v269
    %v271 = vunpack.i.l.s16 %v270
    %v272 = vunpack.i.h.s16 %v270
    %v273 = vcombine.low %v93, %v94
    %v275 = vunpack.c.l.s4 1966171168
    %v276 = vunpack.c.0.s8 %v275
    %v277 = vlaneseq
    %v278 = vshrl.u32 %v277, 7
    %v279 = vsub.s32 %v276, %v278
    %v280 = vrot.slane %v273, %v279
    %v282 = vunpack.c.l.s4 1966171168
    %v283 = vunpack.c.0.s8 %v282
    %v284 = vlaneseq
    %v285 = vshrl.u32 %v284, 7
    %v286 = vsub.s32 %v283, %v285
    %v287 = vrot.slane %v280, %v286
    %v288 = vunpack.i.l.s16 %v287
    %v289 = vunpack.i.h.s16 %v287
    %v292 = vcombine.low %v143, %v144
    %v294 = vunpack.c.l.s4 1966171168
    %v295 = vunpack.c.0.s8 %v294
    %v296 = vlaneseq
    %v297 = vshrl.u32 %v296, 7
    %v298 = vsub.s32 %v295, %v297
    %v299 = vrot.slane %v292, %v298
    %v301 = vunpack.c.l.s4 1966171168
    %v302 = vunpack.c.0.s8 %v301
    %v303 = vlaneseq
    %v304 = vshrl.u32 %v303, 7
    %v305 = vsub.s32 %v302, %v304
    %v306 = vrot.slane %v299, %v305
    %v307 = vunpack.i.l.s16 %v306
    %v308 = vunpack.i.h.s16 %v306
    %v311 = vcombine.low %v158, %v159
    %v313 = vunpack.c.l.s4 1966171168
    %v314 = vunpack.c.0.s8 %v313
    %v315 = vlaneseq
    %v316 = vshrl.u32 %v315, 7
    %v317 = vsub.s32 %v314, %v316
    %v318 = vrot.slane %v311, %v317
    %v320 = vunpack.c.l.s4 1966171168
    %v321 = vunpack.c.0.s8 %v320
    %v322 = vlaneseq
    %v323 = vshrl.u32 %v322, 7
    %v324 = vsub.s32 %v321, %v323
    %v325 = vrot.slane %v318, %v324
    %v326 = vunpack.i.l.s16 %v325
    %v327 = vunpack.i.h.s16 %v325
    %v330 = vcombine.low %v171, %v172
    %v332 = vunpack.c.l.s4 1966171168
    %v333 = vunpack.c.0.s8 %v332
    %v334 = vlaneseq
    %v335 = vshrl.u32 %v334, 7
    %v336 = vsub.s32 %v333, %v335
    %v337 = vrot.slane %v330, %v336
    %v339 = vunpack.c.l.s4 1966171168
    %v340 = vunpack.c.0.s8 %v339
    %v341 = vlaneseq
    %v342 = vshrl.u32 %v341, 7
    %v343 = vsub.s32 %v340, %v342
    %v344 = vrot.slane %v337, %v343
    %v345 = vunpack.i.l.s16 %v344
    %v346 = vunpack.i.h.s16 %v344
    %v349 = vcombine.low %v186, %v187
    %v351 = vunpack.c.l.s4 1966171168
    %v352 = vunpack.c.0.s8 %v351
    %v353 = vlaneseq
    %v354 = vshrl.u32 %v353, 7
    %v355 = vsub.s32 %v352, %v354
    %v356 = vrot.slane %v349, %v355
    %v358 = vunpack.c.l.s4 1966171168
    %v359 = vunpack.c.0.s8 %v358
    %v360 = vlaneseq
    %v361 = vshrl.u32 %v360, 7
    %v362 = vsub.s32 %v359, %v361
    %v363 = vrot.slane %v356, %v362
    %v364 = vunpack.i.l.s16 %v363
    %v365 = vunpack.i.h.s16 %v363
    %v366 = vpack.i.b16 %v205, %v205
    %v367 = vpack.i.b16 %v206, %v206
    %v368 = vlaneseq
    %v369 = vshrl.u32 %v368, 7
    %v370 = vsub.s32 0, %v369
    %v371 = vrot.slane %v366, %v370
    %v372 = vlaneseq
    %v373 = vshrl.u32 %v372, 7
    %v374 = vsub.s32 1, %v373
    %v375 = vrot.slane %v366, %v374
    %v376 = vlaneseq
    %v377 = vshrl.u32 %v376, 7
    %v378 = vsub.s32 0, %v377
    %v379 = vrot.slane %v367, %v378
    %v380 = vlaneseq
    %v381 = vshrl.u32 %v380, 7
    %v382 = vsub.s32 1, %v381
    %v383 = vrot.slane %v367, %v382
    %v388 = vpack.i.b16 %v233, %v233
    %v389 = vpack.i.b16 %v234, %v234
    %v390 = vlaneseq
    %v391 = vshrl.u32 %v390, 7
    %v392 = vsub.s32 0, %v391
    %v393 = vrot.slane %v388, %v392
    %v394 = vlaneseq
    %v395 = vshrl.u32 %v394, 7
    %v396 = vsub.s32 1, %v395
    %v397 = vrot.slane %v388, %v396
    %v398 = vlaneseq
    %v399 = vshrl.u32 %v398, 7
    %v400 = vsub.s32 2, %v399
    %v401 = vrot.slane %v388, %v400
    %v402 = vlaneseq
    %v403 = vshrl.u32 %v402, 7
    %v404 = vsub.s32 0, %v403
    %v405 = vrot.slane %v389, %v404
    %v406 = vlaneseq
    %v407 = vshrl.u32 %v406, 7
    %v408 = vsub.s32 1, %v407
    %v409 = vrot.slane %v389, %v408
    %v410 = vlaneseq
    %v411 = vshrl.u32 %v410, 7
    %v412 = vsub.s32 2, %v411
    %v413 = vrot.slane %v389, %v412
    %414 = vrot.lane.b32.xlu0 %v393, 16
    %v415 = vpop.permute.xlu0 %414
    %416 = vrot.lane.b32.xlu0 %v397, 16
    %v417 = vpop.permute.xlu0 %416
    %418 = vrot.lane.b32.xlu0 %v401, 16
    %v419 = vpop.permute.xlu0 %418
    %420 = vrot.lane.b32.xlu0 %v405, 16
    %v421 = vpop.permute.xlu0 %420
    %422 = vrot.lane.b32.xlu0 %v409, 16
    %v423 = vpop.permute.xlu0 %422
    %424 = vrot.lane.b32.xlu0 %v413, 16
    %v425 = vpop.permute.xlu0 %424
    %vm426 = vcmask 130048
    %v427 = vsel %vm426, %v415, %v417
    %v428 = vsel %vm426, %v417, %v419
    %v429 = vsel %vm426, %v421, %v423
    %v430 = vsel %vm426, %v423, %v425
    %v435 = vpack.i.b16 %v252, %v252
    %v436 = vpack.i.b16 %v253, %v253
    %v437 = vlaneseq
    %v438 = vshrl.u32 %v437, 7
    %v439 = vsub.s32 0, %v438
    %v440 = vrot.slane %v435, %v439
    %v441 = vlaneseq
    %v442 = vshrl.u32 %v441, 7
    %v443 = vsub.s32 1, %v442
    %v444 = vrot.slane %v435, %v443
    %v445 = vlaneseq
    %v446 = vshrl.u32 %v445, 7
    %v447 = vsub.s32 0, %v446
    %v448 = vrot.slane %v436, %v447
    %v449 = vlaneseq
    %v450 = vshrl.u32 %v449, 7
    %v451 = vsub.s32 1, %v450
    %v452 = vrot.slane %v436, %v451
    %v453 = vpack.i.b16 %v271, %v271
    %v454 = vpack.i.b16 %v272, %v272
    %v455 = vlaneseq
    %v456 = vshrl.u32 %v455, 7
    %v457 = vsub.s32 0, %v456
    %v458 = vrot.slane %v453, %v457
    %v459 = vlaneseq
    %v460 = vshrl.u32 %v459, 7
    %v461 = vsub.s32 1, %v460
    %v462 = vrot.slane %v453, %v461
    %v463 = vlaneseq
    %v464 = vshrl.u32 %v463, 7
    %v465 = vsub.s32 0, %v464
    %v466 = vrot.slane %v454, %v465
    %v467 = vlaneseq
    %v468 = vshrl.u32 %v467, 7
    %v469 = vsub.s32 1, %v468
    %v470 = vrot.slane %v454, %v469
    %v475 = vpack.i.b16 %v288, %v288
    %v476 = vpack.i.b16 %v289, %v289
    %v477 = vlaneseq
    %v478 = vshrl.u32 %v477, 7
    %v479 = vsub.s32 0, %v478
    %v480 = vrot.slane %v475, %v479
    %v481 = vlaneseq
    %v482 = vshrl.u32 %v481, 7
    %v483 = vsub.s32 1, %v482
    %v484 = vrot.slane %v475, %v483
    %v485 = vlaneseq
    %v486 = vshrl.u32 %v485, 7
    %v487 = vsub.s32 0, %v486
    %v488 = vrot.slane %v476, %v487
    %v489 = vlaneseq
    %v490 = vshrl.u32 %v489, 7
    %v491 = vsub.s32 1, %v490
    %v492 = vrot.slane %v476, %v491
    %v493 = vpack.i.b16 %v307, %v307
    %v494 = vpack.i.b16 %v308, %v308
    %v495 = vlaneseq
    %v496 = vshrl.u32 %v495, 7
    %v497 = vsub.s32 0, %v496
    %v498 = vrot.slane %v493, %v497
    %v499 = vlaneseq
    %v500 = vshrl.u32 %v499, 7
    %v501 = vsub.s32 1, %v500
    %v502 = vrot.slane %v493, %v501
    %v503 = vlaneseq
    %v504 = vshrl.u32 %v503, 7
    %v505 = vsub.s32 0, %v504
    %v506 = vrot.slane %v494, %v505
    %v507 = vlaneseq
    %v508 = vshrl.u32 %v507, 7
    %v509 = vsub.s32 1, %v508
    %v510 = vrot.slane %v494, %v509
    %v515 = vpack.i.b16 %v326, %v326
    %v516 = vpack.i.b16 %v327, %v327
    %v517 = vlaneseq
    %v518 = vshrl.u32 %v517, 7
    %v519 = vsub.s32 0, %v518
    %v520 = vrot.slane %v515, %v519
    %v521 = vlaneseq
    %v522 = vshrl.u32 %v521, 7
    %v523 = vsub.s32 1, %v522
    %v524 = vrot.slane %v515, %v523
    %v525 = vlaneseq
    %v526 = vshrl.u32 %v525, 7
    %v527 = vsub.s32 0, %v526
    %v528 = vrot.slane %v516, %v527
    %v529 = vlaneseq
    %v530 = vshrl.u32 %v529, 7
    %v531 = vsub.s32 1, %v530
    %v532 = vrot.slane %v516, %v531
    %v533 = vpack.i.b16 %v345, %v345
    %v534 = vpack.i.b16 %v346, %v346
    %v535 = vlaneseq
    %v536 = vshrl.u32 %v535, 7
    %v537 = vsub.s32 0, %v536
    %v538 = vrot.slane %v533, %v537
    %v539 = vlaneseq
    %v540 = vshrl.u32 %v539, 7
    %v541 = vsub.s32 1, %v540
    %v542 = vrot.slane %v533, %v541
    %v543 = vlaneseq
    %v544 = vshrl.u32 %v543, 7
    %v545 = vsub.s32 0, %v544
    %v546 = vrot.slane %v534, %v545
    %v547 = vlaneseq
    %v548 = vshrl.u32 %v547, 7
    %v549 = vsub.s32 1, %v548
    %v550 = vrot.slane %v534, %v549
    %v555 = vpack.i.b16 %v364, %v364
    %v556 = vpack.i.b16 %v365, %v365
    %v557 = vlaneseq
    %v558 = vshrl.u32 %v557, 7
    %v559 = vsub.s32 0, %v558
    %v560 = vrot.slane %v555, %v559
    %v561 = vlaneseq
    %v562 = vshrl.u32 %v561, 7
    %v563 = vsub.s32 1, %v562
    %v564 = vrot.slane %v555, %v563
    %v565 = vlaneseq
    %v566 = vshrl.u32 %v565, 7
    %v567 = vsub.s32 0, %v566
    %v568 = vrot.slane %v556, %v567
    %v569 = vlaneseq
    %v570 = vshrl.u32 %v569, 7
    %v571 = vsub.s32 1, %v570
    %v572 = vrot.slane %v556, %v571
    %vm573 = vcmask 1040384
    %vm574 = vsmask.f32 256
    %vm575 = vmand %vm573, %vm574
    %v576 = vsel %vm575, %v371, %v427
    %v577 = vsel %vm575, %v375, %v428
    %v578 = vsel %vm575, %v379, %v429
    %v579 = vsel %vm575, %v383, %v430
    %vm580 = vcmask 1040384
    %v583 = vsel %vm580, %v576, %v440
    %v587 = vsel %vm580, %v577, %v444
    %v591 = vsel %vm580, %v578, %v448
    %v595 = vsel %vm580, %v579, %v452
    %vm597 = vcmask 1041408
    %vm598 = vsmask.f32 1280
    %vm599 = vmand %vm597, %vm598
    %v600 = vsel %vm599, %v583, %v458
    %v601 = vsel %vm599, %v587, %v462
    %v602 = vsel %vm599, %v591, %v466
    %v603 = vsel %vm599, %v595, %v470
    %vm604 = vcmask 1041408
    %v607 = vsel %vm604, %v600, %v480
    %v611 = vsel %vm604, %v601, %v484
    %v615 = vsel %vm604, %v602, %v488
    %v619 = vsel %vm604, %v603, %v492
    %vm621 = vcmask 1042432
    %vm622 = vsmask.f32 2304
    %vm623 = vmand %vm621, %vm622
    %v624 = vsel %vm623, %v607, %v498
    %v625 = vsel %vm623, %v611, %v502
    %v626 = vsel %vm623, %v615, %v506
    %v627 = vsel %vm623, %v619, %v510
    %vm628 = vcmask 1042432
    %v631 = vsel %vm628, %v624, %v520
    %v635 = vsel %vm628, %v625, %v524
    %v639 = vsel %vm628, %v626, %v528
    %v643 = vsel %vm628, %v627, %v532
    %vm645 = vcmask 1043456
    %vm646 = vsmask.f32 3328
    %vm647 = vmand %vm645, %vm646
    %v648 = vsel %vm647, %v631, %v538
    %v649 = vsel %vm647, %v635, %v542
    %v650 = vsel %vm647, %v639, %v546
    %v651 = vsel %vm647, %v643, %v550
    %vm652 = vcmask 1043456
    %v655 = vsel %vm652, %v648, %v560
    %v659 = vsel %vm652, %v649, %v564
    %v663 = vsel %vm652, %v650, %v568
    %v667 = vsel %vm652, %v651, %v572
    %vm669 = vcmask 1044480
    %vm670 = vsmask.f32 4352
    %vm671 = vmand %vm669, %vm670
    %v672 = vsel %vm671, %v655, 1065369472
    %v673 = vsel %vm671, %v659, 1065369472
    %v674 = vsel %vm671, %v663, 1065369472
    %v675 = vsel %vm671, %v667, 1065369472
    %vm676 = vcmask 1044480
    %v679 = vsel %vm676, %v672, 0
    %v682 = vsel %vm676, %v673, 0
    %v685 = vsel %vm676, %v674, 0
    %v688 = vsel %vm676, %v675, 0
    %vm690 = vcmask 1045504
    %vm691 = vsmask.f32 5376
    %vm692 = vmand %vm690, %vm691
    %v693 = vsel %vm692, %v679, 0
    %v694 = vsel %vm692, %v682, 0
    %v695 = vsel %vm692, %v685, 0
    %v696 = vsel %vm692, %v688, 0
    %vm697 = vcmask 1045504
    %v699 = vsel %vm697, %v693, 0
    %v702 = vsel %vm697, %v694, 0
    %v705 = vsel %vm697, %v695, 0
    %v708 = vsel %vm697, %v696, 0
    %vm710 = vcmask 1046528
    %vm711 = vsmask.f32 6400
    %vm712 = vmand %vm710, %vm711
    %v713 = vsel %vm712, %v699, 0
    %v714 = vsel %vm712, %v702, 0
    %v715 = vsel %vm712, %v705, 0
    %v716 = vsel %vm712, %v708, 0
    %vm717 = vcmask 1046528
    %v719 = vsel %vm717, %v713, 0
    %v722 = vsel %vm717, %v714, 0
    %v725 = vsel %vm717, %v715, 0
    %v728 = vsel %vm717, %v716, 0
    %vm730 = vcmask 1047552
    %vm731 = vsmask.f32 7424
    %vm732 = vmand %vm730, %vm731
    %v733 = vsel %vm732, %v719, 0
    %v734 = vsel %vm732, %v722, 0
    %v735 = vsel %vm732, %v725, 0
    %v736 = vsel %vm732, %v728, 0
    %v737 = vld [vmem:[%s1] sm:$0xf]
    %v738 = vld [vmem:[%s1 + $0x4] sm:$0xf]
    %v739 = vld [vmem:[%s1 + $0x8] sm:$0xf]
    %v740 = vld [vmem:[%s1 + $0xc] sm:$0xf]
    %v745 = vunpack.c.l.b16 %v737
    %v746 = vunpack.c.l.b16 %v738
    %v747 = vunpack.c.l.b16 %v739
    %v748 = vunpack.c.l.b16 %v740
    %v749 = vpack.c.b16 %v746, %v745
    %v750 = vpack.c.b16 %v748, %v747
    %vm751 = vcmask 130048
    %v753 = vsel %vm751, %v749, 0
    %v756 = vsel %vm751, %v750, 0
    %758 = vmatprep.subr.bf16.mxu0 %v734
    %759 = vmatpush1.bf16.msra.mxu0 %v733
    %760 = vmatprep.subr.bf16.mxu0 0
    %761 = vmatpush1.bf16.msra.mxu0 0
    %762 = vmatprep.subr.bf16.mxu0 0
    %763 = vmatpush1.bf16.msra.mxu0 0
    %764 = vmatprep.subr.bf16.mxu0 0
    %765 = vmatpush1.bf16.msra.mxu0 0
    %766 = vmatprep.subr.bf16.mxu0 0
    %767 = vmatpush1.bf16.msra.mxu0 0
    %768 = vmatprep.subr.bf16.mxu0 0
    %769 = vmatpush1.bf16.msra.mxu0 0
    %770 = vmatprep.subr.bf16.mxu0 0
    %771 = vmatpush1.bf16.msra.mxu0 0
    %772 = vmatprep.subr.bf16.mxu0 0
    %773 = vmatpush1.bf16.msra.mxu0 0
    %774 = vmatprep.subr.bf16.mxu0 0
    %775 = vmatpush1.bf16.msra.mxu0 0
    %776 = vmatprep.subr.bf16.mxu0 0
    %777 = vmatpush1.bf16.msra.mxu0 0
    %778 = vmatprep.subr.bf16.mxu0 0
    %779 = vmatpush1.bf16.msra.mxu0 0
    %780 = vmatprep.subr.bf16.mxu0 0
    %781 = vmatpush1.bf16.msra.mxu0 0
    %782 = vmatprep.subr.bf16.mxu0 0
    %783 = vmatpush1.bf16.msra.mxu0 0
    %784 = vmatprep.subr.bf16.mxu0 0
    %785 = vmatpush1.bf16.msra.mxu0 0
    %786 = vmatprep.subr.bf16.mxu0 0
    %787 = vmatpush1.bf16.msra.mxu0 0
    %788 = vmatprep.subr.bf16.mxu0 0
    %789 = vmatpush1.bf16.msra.mxu0 0
    %790 = vmatprep.mubr.bf16.mxu0 0
    %791 = vmatmul.mubr.bf16.gmra.mrb[0].mxu0 %v753
    %v792 = vpop.f32.mrb[0].mxu0
    %v793 = vadd.f32 0.0, %v792
    %v794 = vpop.f32.mrb[0].mxu0
    %v795 = vadd.f32 0.0, %v794
    %v796 = vpop.f32.mrb[0].mxu0
    %v797 = vadd.f32 0.0, %v796
    %v798 = vpop.f32.mrb[0].mxu0
    %v799 = vadd.f32 0.0, %v798
    %800 = vmatprep.mubr.bf16.mxu0 0
    %801 = vmatmul.mubr.bf16.gmra.mrb[0].mxu0 %v756
    %v802 = vpop.f32.mrb[0].mxu0
    %v803 = vadd.f32 0.0, %v802
    %v804 = vpop.f32.mrb[0].mxu0
    %v805 = vadd.f32 0.0, %v804
    %v806 = vpop.f32.mrb[0].mxu0
    %v807 = vadd.f32 0.0, %v806
    %v808 = vpop.f32.mrb[0].mxu0
    %v809 = vadd.f32 0.0, %v808
    %810 = vdwg.mxu0
    %811 = vmatprep.subr.bf16.mxu0 %v736
    %812 = vmatpush1.bf16.msra.mxu0 %v735
    %813 = vmatprep.subr.bf16.mxu0 0
    %814 = vmatpush1.bf16.msra.mxu0 0
    %815 = vmatprep.subr.bf16.mxu0 0
    %816 = vmatpush1.bf16.msra.mxu0 0
    %817 = vmatprep.subr.bf16.mxu0 0
    %818 = vmatpush1.bf16.msra.mxu0 0
    %819 = vmatprep.subr.bf16.mxu0 0
    %820 = vmatpush1.bf16.msra.mxu0 0
    %821 = vmatprep.subr.bf16.mxu0 0
    %822 = vmatpush1.bf16.msra.mxu0 0
    %823 = vmatprep.subr.bf16.mxu0 0
    %824 = vmatpush1.bf16.msra.mxu0 0
    %825 = vmatprep.subr.bf16.mxu0 0
    %826 = vmatpush1.bf16.msra.mxu0 0
    %827 = vmatprep.subr.bf16.mxu0 0
    %828 = vmatpush1.bf16.msra.mxu0 0
    %829 = vmatprep.subr.bf16.mxu0 0
    %830 = vmatpush1.bf16.msra.mxu0 0
    %831 = vmatprep.subr.bf16.mxu0 0
    %832 = vmatpush1.bf16.msra.mxu0 0
    %833 = vmatprep.subr.bf16.mxu0 0
    %834 = vmatpush1.bf16.msra.mxu0 0
    %835 = vmatprep.subr.bf16.mxu0 0
    %836 = vmatpush1.bf16.msra.mxu0 0
    %837 = vmatprep.subr.bf16.mxu0 0
    %838 = vmatpush1.bf16.msra.mxu0 0
    %839 = vmatprep.subr.bf16.mxu0 0
    %840 = vmatpush1.bf16.msra.mxu0 0
    %841 = vmatprep.subr.bf16.mxu0 0
    %842 = vmatpush1.bf16.msra.mxu0 0
    %843 = vmatprep.mubr.bf16.mxu0 0
    %844 = vmatmul.mubr.bf16.gmra.mrb[0].mxu0 %v753
    %v845 = vpop.f32.mrb[0].mxu0
    %v846 = vadd.f32 0.0, %v845
    %v847 = vpop.f32.mrb[0].mxu0
    %v848 = vadd.f32 0.0, %v847
    %v849 = vpop.f32.mrb[0].mxu0
    %v850 = vadd.f32 0.0, %v849
    %v851 = vpop.f32.mrb[0].mxu0
    %v852 = vadd.f32 0.0, %v851
    %853 = vmatprep.mubr.bf16.mxu0 0
    %854 = vmatmul.mubr.bf16.gmra.mrb[0].mxu0 %v756
    %v855 = vpop.f32.mrb[0].mxu0
    %v856 = vadd.f32 0.0, %v855
    %v857 = vpop.f32.mrb[0].mxu0
    %v858 = vadd.f32 0.0, %v857
    %v859 = vpop.f32.mrb[0].mxu0
    %v860 = vadd.f32 0.0, %v859
    %v861 = vpop.f32.mrb[0].mxu0
    %v862 = vadd.f32 0.0, %v861
    %863 = vdwg.mxu0
    %v864 = vmax.f32 %v793, 0.0
    %v865 = vmax.f32 %v795, 0.0
    %v866 = vmax.f32 %v797, 0.0
    %v867 = vmax.f32 %v799, 0.0
    %v868 = vmax.f32 %v803, 0.0
    %v869 = vmax.f32 %v805, 0.0
    %v870 = vmax.f32 %v807, 0.0
    %v871 = vmax.f32 %v809, 0.0
    %v872 = vmax.f32 %v846, 0.0
    %v873 = vmax.f32 %v848, 0.0
    %v874 = vmax.f32 %v850, 0.0
    %v875 = vmax.f32 %v852, 0.0
    %v876 = vmax.f32 %v856, 0.0
    %v877 = vmax.f32 %v858, 0.0
    %v878 = vmax.f32 %v860, 0.0
    %v879 = vmax.f32 %v862, 0.0
    %v880 = vadd.f32 %v864, %v865
    %881 = vadd.xlane.f32.xlu0 %v880
    %v882 = vpop.xlane.xlu0 %881
    %v883 = vadd.f32 %v866, %v867
    %884 = vadd.xlane.f32.xlu0 %v883
    %v885 = vpop.xlane.xlu0 %884
    %v886 = vadd.f32 %v868, %v869
    %887 = vadd.xlane.f32.xlu0 %v886
    %v888 = vpop.xlane.xlu0 %887
    %v889 = vadd.f32 %v870, %v871
    %890 = vadd.xlane.f32.xlu0 %v889
    %v891 = vpop.xlane.xlu0 %890
    %v892 = vadd.f32 %v872, %v873
    %893 = vadd.xlane.f32.xlu0 %v892
    %v894 = vpop.xlane.xlu0 %893
    %v895 = vadd.f32 %v874, %v875
    %896 = vadd.xlane.f32.xlu0 %v895
    %v897 = vpop.xlane.xlu0 %896
    %v898 = vadd.f32 %v876, %v877
    %899 = vadd.xlane.f32.xlu0 %v898
    %v900 = vpop.xlane.xlu0 %899
    %v901 = vadd.f32 %v878, %v879
    %902 = vadd.xlane.f32.xlu0 %v901
    %v903 = vpop.xlane.xlu0 %902
    %v904 = vld [vmem:[%s2] sm:$0x1]
    %s905 = sld [smem:[#allocation2]]
    %v906 = vstv %s905
    %v915 = vlaneseq
    %v916 = vshrl.u32 %v915, 7
    %v917 = vsub.s32 %v23, %v916
    %v918 = vrot.slane %v882, %v917
    %v919 = vadd.s32 %v23, 4294967288
    %v920 = vlaneseq
    %v921 = vshrl.u32 %v920, 7
    %v922 = vsub.s32 %v919, %v921
    %v923 = vrot.slane %v885, %v922
    %vm924 = vcmask 130112
    %v925 = vsel %vm924, %v923, %v918
    %v926 = vadd.s32 %v23, 4294967280
    %v927 = vlaneseq
    %v928 = vshrl.u32 %v927, 7
    %v929 = vsub.s32 %v926, %v928
    %v930 = vrot.slane %v888, %v929
    %vm931 = vcmask 195712
    %v932 = vsel %vm931, %v930, %v925
    %v933 = vadd.s32 %v23, 4294967272
    %v934 = vlaneseq
    %v935 = vshrl.u32 %v934, 7
    %v936 = vsub.s32 %v933, %v935
    %v937 = vrot.slane %v891, %v936
    %vm938 = vcmask 261312
    %v939 = vsel %vm938, %v937, %v932
    %v940 = vlaneseq
    %v941 = vshrl.u32 %v940, 7
    %v942 = vsub.s32 %v23, %v941
    %v943 = vrot.slane %v894, %v942
    %v944 = vlaneseq
    %v945 = vshrl.u32 %v944, 7
    %v946 = vsub.s32 %v919, %v945
    %v947 = vrot.slane %v897, %v946
    %v948 = vsel %vm924, %v947, %v943
    %v949 = vlaneseq
    %v950 = vshrl.u32 %v949, 7
    %v951 = vsub.s32 %v926, %v950
    %v952 = vrot.slane %v900, %v951
    %v953 = vsel %vm931, %v952, %v948
    %v954 = vlaneseq
    %v955 = vshrl.u32 %v954, 7
    %v956 = vsub.s32 %v933, %v955
    %v957 = vrot.slane %v903, %v956
    %v958 = vsel %vm938, %v957, %v953
    %vm959 = vcmask 1041409
    %v960 = vsel %vm959, %v958, %v939
    %vm961 = vcmask 261120
    %v963 = vsel %vm961, %v904, 0
    %v965 = vsel %vm961, %v960, 0
    %967 = vmatprep.subr.mxu0 0.0
    %968 = vmatpush1.xpose.msra.mxu0 %v965
    %969 = vmatprep.subr.mxu0 0.0
    %970 = vmatpush1.xpose.msra.mxu0 0.0
    %971 = vmatprep.subr.mxu0 0.0
    %972 = vmatpush1.xpose.msra.mxu0 0.0
    %973 = vmatprep.subr.mxu0 0.0
    %974 = vmatpush1.xpose.msra.mxu0 0.0
    %975 = vmatprep.subr.mxu0 0.0
    %976 = vmatpush1.xpose.msra.mxu0 0.0
    %977 = vmatprep.subr.mxu0 0.0
    %978 = vmatpush1.xpose.msra.mxu0 0.0
    %979 = vmatprep.subr.mxu0 0.0
    %980 = vmatpush1.xpose.msra.mxu0 0.0
    %981 = vmatprep.subr.mxu0 0.0
    %982 = vmatpush1.xpose.msra.mxu0 0.0
    %983 = vmatprep.subr.mxu0 0.0
    %984 = vmatpush1.xpose.msra.mxu0 0.0
    %985 = vmatprep.subr.mxu0 0.0
    %986 = vmatpush1.xpose.msra.mxu0 0.0
    %987 = vmatprep.subr.mxu0 0.0
    %988 = vmatpush1.xpose.msra.mxu0 0.0
    %989 = vmatprep.subr.mxu0 0.0
    %990 = vmatpush1.xpose.msra.mxu0 0.0
    %991 = vmatprep.subr.mxu0 0.0
    %992 = vmatpush1.xpose.msra.mxu0 0.0
    %993 = vmatprep.subr.mxu0 0.0
    %994 = vmatpush1.xpose.msra.mxu0 0.0
    %995 = vmatprep.subr.mxu0 0.0
    %996 = vmatpush1.xpose.msra.mxu0 0.0
    %997 = vmatprep.subr.mxu0 0.0
    %998 = vmatpush1.xpose.msra.mxu0 0.0
    %999 = vmatprep.subr.mxu0 0.0
    %1000 = vmatpush1.xpose.msra.mxu0 0.0
    %1001 = vmatprep.subr.mxu0 0.0
    %1002 = vmatpush1.xpose.msra.mxu0 0.0
    %1003 = vmatprep.subr.mxu0 0.0
    %1004 = vmatpush1.xpose.msra.mxu0 0.0
    %1005 = vmatprep.subr.mxu0 0.0
    %1006 = vmatpush1.xpose.msra.mxu0 0.0
    %1007 = vmatprep.subr.mxu0 0.0
    %1008 = vmatpush1.xpose.msra.mxu0 0.0
    %1009 = vmatprep.subr.mxu0 0.0
    %1010 = vmatpush1.xpose.msra.mxu0 0.0
    %1011 = vmatprep.subr.mxu0 0.0
    %1012 = vmatpush1.xpose.msra.mxu0 0.0
    %1013 = vmatprep.subr.mxu0 0.0
    %1014 = vmatpush1.xpose.msra.mxu0 0.0
    %1015 = vmatprep.subr.mxu0 0.0
    %1016 = vmatpush1.xpose.msra.mxu0 0.0
    %1017 = vmatprep.subr.mxu0 0.0
    %1018 = vmatpush1.xpose.msra.mxu0 0.0
    %1019 = vmatprep.subr.mxu0 0.0
    %1020 = vmatpush1.xpose.msra.mxu0 0.0
    %1021 = vmatprep.subr.mxu0 0.0
    %1022 = vmatpush1.xpose.msra.mxu0 0.0
    %1023 = vmatprep.subr.mxu0 0.0
    %1024 = vmatpush1.xpose.msra.mxu0 0.0
    %1025 = vmatprep.subr.mxu0 0.0
    %1026 = vmatpush1.xpose.msra.mxu0 0.0
    %1027 = vmatprep.subr.mxu0 0.0
    %1028 = vmatpush1.xpose.msra.mxu0 0.0
    %1029 = vmatprep.subr.mxu0 0.0
    %1030 = vmatpush1.xpose.msra.mxu0 0.0
    %1031 = vmatprep.mubr.f32.mxu0 0.0
    %1032 = vmatmul.mubr.f32.gmra.mrb[0].mxu0 %v963
    %v1033 = vpop.f32.mrb[0].mxu0
    %v1034 = vadd.f32 %v906, %v1033
    %v1035 = vpop.f32.mrb[0].mxu0
    %1036 = vdwg.mxu0
    %v1037 = vxor.u32 %v1034, 2147483648
    %v1038 = vmul.f32 %v1037, 1.442695
    %v1039 = vpow.pop %v1038
    %v1040 = vadd.f32 %v1039, 1.0
    %v1041 = vrcp.pop %v1040
    %v1042 = vmul.f32 1.0, %v1041
    %vm1043 = vcmask 15360
    %v1044 = vsel %vm1043, %v1042, 0.0
    %1045 = vst [vmem:[#allocation3] sm:$0x1] %v1044
    // Predicated region
    $region18: #{tpu_custom_call.1} parent=1 // pred_check
      _
    $region19: #{tpu_custom_call.1} parent=1 // pred_check_branch
      %1047 = sbr.rel (0) target = $region21
    $region20: #{tpu_custom_call.1} parent=1 // pred_region
      %s1049 = ssub.s32 16, 16
      %1050 = vsyncadd [#allocation4], %s1049
      %s1052 = sshll.u32 [#allocation3], 4
      %s1053 = int_to_ptr.vmem [resolvable:$true] %s1052
      %1055 = dma.vmem_to_hbm [thread:$0]  %s1053, 16, %s4, [#allocation4]
    $region21: #{tpu_custom_call.1} parent=1 // pred_fallthru
      _
    // Predicated region
    $region22: #{tpu_custom_call.1} parent=1 // pred_check
      _
    $region23: #{tpu_custom_call.1} parent=1 // pred_check_branch
      %1057 = sbr.rel (0) target = $region25
    $region24: #{tpu_custom_call.1} parent=1 // pred_region
      %1058 = dma.done [#allocation4], 16
    $region25: #{tpu_custom_call.1} parent=1 // pred_fallthru
      _
    %1059 = vsyncpa [#allocation4], 1

</llo_original>
